<compile_context>
chip_gen: v5e
topology: v5e:2x2
jax: 0.10.0
libtpu: 0.0.40
codegen_flags: <defaults>
</compile_context>

<pallas_src>
import functools
import math

import jax
import jax.numpy as jnp
from jax.experimental import pallas as pl
from jax.experimental.pallas import tpu as pltpu

LANE = 128
SUBLANE_PACK = 32        # round block rows to 32 -> safe sublane packing for f32/bf16/int8
MAX_BLOCK_ROWS = 4096    # (4096, 128) f32 block = 2 MiB per input


def _round_up(x, m):
    return ((x + m - 1) // m) * m


def _slide_loss_kernel(pred_ref, true_ref, out_ref, acc_ref, *,
                       auto_iou, num_splits, blocks_per_split,
                       need_mask, row0_last, full_rows, tail_lanes):
    """One (block_rows, 128) tile: BCE-with-logits * slide weight, partial sum."""
    c = pl.program_id(0)   # split index ("parallel"; both TCs on v7x)
    i = pl.program_id(1)   # block index within the split ("arbitrary")

    @pl.when(i == 0)
    def _():
        acc_ref[...] = jnp.zeros_like(acc_ref)

    x = pred_ref[...].astype(jnp.float32)   # logits (native dtype in HBM)
    y = true_ref[...].astype(jnp.float32)   # IoU-like targets in [0, 1]

    # BCEWithLogitsLoss(reduction='none'), numerically stable:
    #   max(x,0) - x*y + log(1 + exp(-|x|))
    # (exp + log1p + the weight exp below = 3 EUP ops/element; with bf16
    #  inputs this is the likely binding unit on v6e/v7x -- profiling item,
    #  no cheaper algebraic form found.)
    loss = jnp.maximum(x, 0.0) - x * y + jnp.log1p(jnp.exp(-jnp.abs(x)))

    # Slide modulating weight (disjoint branches -> nested selects).
    #   y <= auto_iou-0.1           -> 1.0
    #   auto_iou-0.1 < y < auto_iou -> exp(1 - auto_iou)   (constant)
    #   y >= auto_iou               -> exp(-(y-1)) == exp(1-y)
    a2 = math.exp(1.0 - auto_iou)
    w = jnp.where(y >= auto_iou,
                  jnp.exp(1.0 - y),
                  jnp.where(y > auto_iou - 0.1, a2, 1.0))
    loss = loss * w

    if need_mask:
        # Only the single globally-last block can contain invalid rows/lanes
        # (ragged last block reads unspecified VMEM; lane padding reads zeros).
        # All the mask work is gated by pl.when so every other block pays
        # nothing; indices are row/lane comparisons (no flat int32 index).
        is_last = (c == num_splits - 1) & (i == blocks_per_split - 1)

        @pl.when(is_last)
        def _():
            shape = loss.shape
            grow = row0_last + jax.lax.broadcasted_iota(jnp.int32, shape, 0)
            valid = grow < full_rows
            if tail_lanes:
                lane = jax.lax.broadcasted_iota(jnp.int32, shape, 1)
                valid = valid | ((grow == full_rows) & (lane < tail_lanes))
            acc_ref[...] += jnp.where(valid, loss, 0.0)

        @pl.when(jnp.logical_not(is_last))
        def _():
            acc_ref[...] += loss
    else:
        # Full-block accumulator: independent VPU adds, no reduction chain.
        acc_ref[...] += loss

    # One cross-sublane reduce per split at the very end; lane-dense store.
    @pl.when(i == blocks_per_split - 1)
    def _():
        out_ref[...] = jnp.sum(acc_ref[...], axis=0, keepdims=True)


def slide_loss(pred, true, auto_iou=0.5, reduction="mean"):
    """pred, true: arrays of identical shape (e.g. NCHW). Returns scalar f32.

    Note: auto_iou is baked in as a static Python float; passing a traced
    value would trigger a recompile per distinct value.
    """
    if auto_iou < 0.2:
        auto_iou = 0.2

    assert pred.shape == true.shape
    n = int(pred.size)
    itemsize = jnp.dtype(pred.dtype).itemsize

    pred_flat = pred.reshape(-1)
    true_flat = true.reshape(-1)

    full_rows, tail_lanes = divmod(n, LANE)
    rows = full_rows + (1 if tail_lanes else 0)
    if tail_lanes:
        # Lane-unaligned input: pad only up to the next 128 multiple; the
        # padded zeros are masked in-kernel.  This is the one remaining
        # full-array copy and never triggers for 128-divisible inputs.
        # TODO(synk): a 1-D-block / manual-DMA path would avoid this copy for
        # lane-unaligned inputs as well.
        pad = LANE - tail_lanes
        pred_flat = jnp.pad(pred_flat, (0, pad))
        true_flat = jnp.pad(true_flat, (0, pad))
    pred2d = pred_flat.reshape(rows, LANE)
    true2d = true_flat.reshape(rows, LANE)

    # Tiling.  Ragged last block (no padding to a block multiple); mask only
    # when statically required.
    block_rows = min(MAX_BLOCK_ROWS, _round_up(rows, SUBLANE_PACK))
    total_blocks = (rows + block_rows - 1) // block_rows
    num_splits = 2 if (total_blocks >= 2 and total_blocks % 2 == 0) else 1
    blocks_per_split = total_blocks // num_splits

    need_mask = (tail_lanes != 0) or (rows % block_rows != 0)
    row0_last = (total_blocks - 1) * block_rows

    kernel = functools.partial(
        _slide_loss_kernel,
        auto_iou=float(auto_iou),
        num_splits=num_splits,
        blocks_per_split=blocks_per_split,
        need_mask=need_mask,
        row0_last=row0_last,
        full_rows=full_rows,
        tail_lanes=tail_lanes,
    )

    in_map = lambda c, i: (c * blocks_per_split + i, 0)

    cost = pl.CostEstimate(
        flops=10 * n,
        transcendentals=3 * n,
        bytes_accessed=2 * n * itemsize + num_splits * LANE * 4,
    )

    partials = pl.pallas_call(
        kernel,
        out_shape=jax.ShapeDtypeStruct((num_splits, LANE), jnp.float32),
        grid_spec=pltpu.PrefetchScalarGridSpec(
            num_scalar_prefetch=0,
            grid=(num_splits, blocks_per_split),
            in_specs=[
                pl.BlockSpec((block_rows, LANE), in_map),
                pl.BlockSpec((block_rows, LANE), in_map),
            ],
            out_specs=pl.BlockSpec((1, LANE), lambda c, i: (c, 0)),
            scratch_shapes=[pltpu.VMEM((block_rows, LANE), jnp.float32)],
        ),
        compiler_params=pltpu.CompilerParams(
            dimension_semantics=("parallel", "arbitrary"),
        ),
        cost_estimate=cost,
    )(pred2d, true2d)

    total = jnp.sum(partials)
    if reduction == "mean":
        return total / n
    elif reduction == "sum":
        return total
    else:
        # TODO(synk): reduction='none' (elementwise weighted loss map) is not
        # implemented in the Pallas path; only 'mean'/'sum' are supported.
        raise NotImplementedError("reduction='none' not supported")


def slide_loss_ref(pred, true, auto_iou=0.5):
    """Pure-JAX reference (mirrors the PyTorch forward exactly, 'mean')."""
    if auto_iou < 0.2:
        auto_iou = 0.2
    x = pred.astype(jnp.float32)
    y = true.astype(jnp.float32)
    loss = jnp.maximum(x, 0.0) - x * y + jnp.log1p(jnp.exp(-jnp.abs(x)))
    b1 = (y <= auto_iou - 0.1).astype(jnp.float32)
    b2 = ((y > auto_iou - 0.1) & (y < auto_iou)).astype(jnp.float32)
    b3 = (y >= auto_iou).astype(jnp.float32)
    w = 1.0 * b1 + math.exp(1.0 - auto_iou) * b2 + jnp.exp(-(y - 1.0)) * b3
    return jnp.mean(loss * w)


if __name__ == "__main__":
    key = jax.random.PRNGKey(0)
    k1, k2 = jax.random.split(key)

    # 1) Small NCHW objectness/cls-style map (128-divisible -> no pad copy).
    B, C, H, W = 2, 4, 16, 16
    pred = jax.random.normal(k1, (B, C, H, W), dtype=jnp.float32)    # logits
    true = jax.random.uniform(k2, (B, C, H, W), dtype=jnp.float32)   # targets in [0,1]
    out = jax.block_until_ready(slide_loss(pred, true, auto_iou=0.5))
    ref = slide_loss_ref(pred, true, auto_iou=0.5)
    assert jnp.allclose(out, ref, rtol=1e-5, atol=1e-5), (out, ref)

    # 2) Lane-unaligned shape -> exercises the masked ragged-tail path.
    pred_odd = jax.random.normal(k1, (3, 5, 7, 11), dtype=jnp.float32)
    true_odd = jax.random.uniform(k2, (3, 5, 7, 11), dtype=jnp.float32)
    out_odd = jax.block_until_ready(slide_loss(pred_odd, true_odd, auto_iou=0.5))
    ref_odd = slide_loss_ref(pred_odd, true_odd, auto_iou=0.5)
    assert jnp.allclose(out_odd, ref_odd, rtol=1e-5, atol=1e-5), (out_odd, ref_odd)

    # 3) Larger block-divisible shape -> exercises the 2-way split and the
    #    multi-block accumulation loop (no mask, no pad).
    pred_big = jax.random.normal(k1, (2, 4, 256, 1024), dtype=jnp.float32)
    true_big = jax.random.uniform(k2, (2, 4, 256, 1024), dtype=jnp.float32)
    out_big = jax.block_until_ready(slide_loss(pred_big, true_big, auto_iou=0.5))
    ref_big = slide_loss_ref(pred_big, true_big, auto_iou=0.5)
    assert jnp.allclose(out_big, ref_big, rtol=1e-4, atol=1e-5), (out_big, ref_big)

    # 4) bf16 inputs streamed in native dtype (upcast in-register).
    pred_bf = pred.astype(jnp.bfloat16)
    true_bf = true.astype(jnp.bfloat16)
    out_bf = jax.block_until_ready(slide_loss(pred_bf, true_bf, auto_iou=0.5))
    ref_bf = slide_loss_ref(pred_bf, true_bf, auto_iou=0.5)
    assert jnp.allclose(out_bf, ref_bf, rtol=1e-4, atol=1e-4), (out_bf, ref_bf)

    print("KERNEL_OK")
</pallas_src>

<mosaic_0001>
module attributes {stable_mosaic.version = 11 : i64} {
  func.func @_slide_loss_kernel(%arg0: i32, %arg1: i32, %arg2: memref<32x128xf32, #tpu.memory_space<vmem>>, %arg3: memref<32x128xf32, #tpu.memory_space<vmem>>, %arg4: memref<1x128xf32, #tpu.memory_space<vmem>>, %arg5: memref<32x128xf32, #tpu.memory_space<vmem>>) attributes {dimension_semantics = [#tpu.dimension_semantics<parallel>, #tpu.dimension_semantics<arbitrary>], iteration_bounds = array<i64: 1, 1>, scalar_prefetch = 0 : i64, scratch_operands = 1 : i64, tpu.core_type = #tpu.core_type<tc>, window_params = [{transform_indices = @transform_0, window_bounds = array<i64: 32, 128>}, {transform_indices = @transform_1, window_bounds = array<i64: 32, 128>}, {transform_indices = @transform_2, window_bounds = array<i64: 1, 128>}]} {
    %c0_i32 = arith.constant 0 : i32
    %0 = arith.cmpi eq, %arg1, %c0_i32 : i32
    %1 = arith.extui %0 : i1 to i32
    %c0_i32_0 = arith.constant 0 : i32
    %2 = arith.cmpi ne, %1, %c0_i32_0 : i32
    scf.if %2 {
      %cst_16 = arith.constant 0.000000e+00 : f32
      %38 = vector.broadcast %cst_16 : f32 to vector<32x128xf32>
      %c0_17 = arith.constant 0 : index
      %c0_18 = arith.constant 0 : index
      %39 = vector.load %arg5[%c0_17, %c0_18] : memref<32x128xf32, #tpu.memory_space<vmem>>, vector<32x128xf32>
      tpu.vector_store %arg5[%c0_17, %c0_18], %38 {strides = array<i32>} : memref<32x128xf32, #tpu.memory_space<vmem>>, vector<32x128xf32>,
    } else {
    }
    %c0 = arith.constant 0 : index
    %c0_1 = arith.constant 0 : index
    %3 = vector.load %arg2[%c0, %c0_1] : memref<32x128xf32, #tpu.memory_space<vmem>>, vector<32x128xf32>
    %c0_2 = arith.constant 0 : index
    %c0_3 = arith.constant 0 : index
    %4 = vector.load %arg3[%c0_2, %c0_3] : memref<32x128xf32, #tpu.memory_space<vmem>>, vector<32x128xf32>
    %cst = arith.constant 0.000000e+00 : f32
    %5 = vector.broadcast %cst : f32 to vector<32x128xf32>
    %6 = arith.maximumf %3, %5 : vector<32x128xf32>
    %7 = arith.mulf %3, %4 : vector<32x128xf32>
    %8 = arith.subf %6, %7 : vector<32x128xf32>
    %9 = math.absf %3 : vector<32x128xf32>
    %cst_4 = arith.constant 0.000000e+00 : f32
    %10 = vector.broadcast %cst_4 : f32 to vector<32x128xf32>
    %11 = arith.subf %10, %9 : vector<32x128xf32>
    %12 = math.exp %11 : vector<32x128xf32>
    %13 = math.log1p %12 : vector<32x128xf32>
    %14 = arith.addf %8, %13 : vector<32x128xf32>
    %cst_5 = arith.constant 5.000000e-01 : f32
    %15 = vector.broadcast %cst_5 : f32 to vector<32x128xf32>
    %16 = arith.cmpf oge, %4, %15 : vector<32x128xf32>
    %cst_6 = arith.constant 1.000000e+00 : f32
    %17 = vector.broadcast %cst_6 : f32 to vector<32x128xf32>
    %18 = arith.subf %17, %4 : vector<32x128xf32>
    %19 = math.exp %18 : vector<32x128xf32>
    %cst_7 = arith.constant 4.000000e-01 : f32
    %20 = vector.broadcast %cst_7 : f32 to vector<32x128xf32>
    %21 = arith.cmpf ogt, %4, %20 : vector<32x128xf32>
    %cst_8 = arith.constant 1.64872122 : f32
    %cst_9 = arith.constant 1.000000e+00 : f32
    %22 = vector.broadcast %cst_8 : f32 to vector<32x128xf32>
    %23 = vector.broadcast %cst_9 : f32 to vector<32x128xf32>
    %24 = arith.select %21, %22, %23 : vector<32x128xi1>, vector<32x128xf32>
    %25 = arith.select %16, %19, %24 : vector<32x128xi1>, vector<32x128xf32>
    %26 = arith.mulf %14, %25 : vector<32x128xf32>
    %c0_i32_10 = arith.constant 0 : i32
    %27 = arith.cmpi eq, %arg0, %c0_i32_10 : i32
    %c0_i32_11 = arith.constant 0 : i32
    %28 = arith.cmpi eq, %arg1, %c0_i32_11 : i32
    %29 = arith.andi %27, %28 : i1
    %30 = arith.extui %29 : i1 to i32
    %c0_i32_12 = arith.constant 0 : i32
    %31 = arith.cmpi ne, %30, %c0_i32_12 : i32
    scf.if %31 {
      %38 = tpu.iota {dimensions = array<i32: 0>} : vector<32x128xi32>
      %c0_i32_16 = arith.constant 0 : i32
      %39 = vector.broadcast %c0_i32_16 : i32 to vector<32x128xi32>
      %40 = arith.addi %39, %38 : vector<32x128xi32>
      %c16_i32 = arith.constant 16 : i32
      %41 = vector.broadcast %c16_i32 : i32 to vector<32x128xi32>
      %42 = arith.cmpi slt, %40, %41 : vector<32x128xi32>
      %c0_17 = arith.constant 0 : index
      %c0_18 = arith.constant 0 : index
      %43 = vector.load %arg5[%c0_17, %c0_18] : memref<32x128xf32, #tpu.memory_space<vmem>>, vector<32x128xf32>
      %cst_19 = arith.constant 0.000000e+00 : f32
      %44 = vector.broadcast %cst_19 : f32 to vector<32x128xf32>
      %45 = arith.select %42, %26, %44 : vector<32x128xi1>, vector<32x128xf32>
      %46 = arith.addf %43, %45 : vector<32x128xf32>
      %c0_20 = arith.constant 0 : index
      %c0_21 = arith.constant 0 : index
      %47 = vector.load %arg5[%c0_20, %c0_21] : memref<32x128xf32, #tpu.memory_space<vmem>>, vector<32x128xf32>
      tpu.vector_store %arg5[%c0_20, %c0_21], %46 {strides = array<i32>} : memref<32x128xf32, #tpu.memory_space<vmem>>, vector<32x128xf32>,
    } else {
    }
    %true = arith.constant true
    %32 = arith.xori %29, %true : i1
    %33 = arith.extui %32 : i1 to i32
    %c0_i32_13 = arith.constant 0 : i32
    %34 = arith.cmpi ne, %33, %c0_i32_13 : i32
    scf.if %34 {
      %c0_16 = arith.constant 0 : index
      %c0_17 = arith.constant 0 : index
      %38 = vector.load %arg5[%c0_16, %c0_17] : memref<32x128xf32, #tpu.memory_space<vmem>>, vector<32x128xf32>
      %39 = arith.addf %38, %26 : vector<32x128xf32>
      %c0_18 = arith.constant 0 : index
      %c0_19 = arith.constant 0 : index
      %40 = vector.load %arg5[%c0_18, %c0_19] : memref<32x128xf32, #tpu.memory_space<vmem>>, vector<32x128xf32>
      tpu.vector_store %arg5[%c0_18, %c0_19], %39 {strides = array<i32>} : memref<32x128xf32, #tpu.memory_space<vmem>>, vector<32x128xf32>,
    } else {
    }
    %c0_i32_14 = arith.constant 0 : i32
    %35 = arith.cmpi eq, %arg1, %c0_i32_14 : i32
    %36 = arith.extui %35 : i1 to i32
    %c0_i32_15 = arith.constant 0 : i32
    %37 = arith.cmpi ne, %36, %c0_i32_15 : i32
    scf.if %37 {
      %c0_16 = arith.constant 0 : index
      %c0_17 = arith.constant 0 : index
      %38 = vector.load %arg5[%c0_16, %c0_17] : memref<32x128xf32, #tpu.memory_space<vmem>>, vector<32x128xf32>
      %cst_18 = arith.constant dense<0.000000e+00> : vector<128xf32>
      %39 = vector.multi_reduction <add>, %38, %cst_18 [0] : vector<32x128xf32> to vector<128xf32>
      %40 = vector.shape_cast %39 : vector<128xf32> to vector<1x128xf32>
      %c0_19 = arith.constant 0 : index
      %c0_20 = arith.constant 0 : index
      %41 = vector.load %arg4[%c0_19, %c0_20] : memref<1x128xf32, #tpu.memory_space<vmem>>, vector<1x128xf32>
      tpu.vector_store %arg4[%c0_19, %c0_20], %40 {strides = array<i32>} : memref<1x128xf32, #tpu.memory_space<vmem>>, vector<1x128xf32>,
    } else {
    }
    return
  }
  func.func @transform_0(%arg0: i32, %arg1: i32) -> (i32, i32) {
    %c1_i32 = arith.constant 1 : i32
    %0 = arith.muli %arg0, %c1_i32 : i32
    %1 = arith.addi %0, %arg1 : i32
    %c0_i32 = arith.constant 0 : i32
    %c0_i32_0 = arith.constant 0 : i32
    return %1, %c0_i32 : i32, i32
  }
  func.func @transform_1(%arg0: i32, %arg1: i32) -> (i32, i32) {
    %c1_i32 = arith.constant 1 : i32
    %0 = arith.muli %arg0, %c1_i32 : i32
    %1 = arith.addi %0, %arg1 : i32
    %c0_i32 = arith.constant 0 : i32
    %c0_i32_0 = arith.constant 0 : i32
    return %1, %c0_i32 : i32, i32
  }
  func.func @transform_2(%arg0: i32, %arg1: i32) -> (i32, i32) {
    %c0_i32 = arith.constant 0 : i32
    %c0_i32_0 = arith.constant 0 : i32
    return %arg0, %c0_i32 : i32, i32
  }
}

</mosaic_0001>

<llo_original>
// kernel: tpu_custom_call.1
$region0: #{tpu_custom_call.1}
  #allocation0 [shape = 'u32[]', space=smem, size = 0x4, offset = 0x4, fixed_abs, tag = 'smem constant byte address 0x4 - core index']
  #allocation1 [shape = 'u32[72,128]{1,0:T(1,128)}', space=vmem, size = 0x9000, scoped, tag = 'internal scratch']
  #allocation2 [shape = 'f32[32,128]{1,0:T(8,128)}', space=vmem, size = 0x4000, scoped, tag = 'scratch operand']
  %s0 = inlined_call_operand.hbm [shape: f32[16,128], index: 0, kind: input, shape index: {}]
  %s1 = inlined_call_operand.hbm [shape: f32[16,128], index: 1, kind: input, shape index: {}]
  %s2 = inlined_call_operand.hbm [shape: f32[1,128], index: 2, kind: output, shape index: {}]
  %s3 = sld [smem:[#allocation0]]
  $region42: #{tpu_custom_call.1} parent=0
    _
  %s5 = ssub.s32 1, %s3
  %s6 = scalar_select 0, %s5, %s3
  $region1: #{tpu_custom_call.1} parent=0
    #allocation3 [shape = 'u8[16384]{0}', space=vmem, size = 0x4000, scoped, tag = 'input window, operand 0, single buffered']
    #allocation4 [shape = 's32[1]{0}', space=sflag, size = 0x4, scoped, tag = 'scoped memory for tpu_custom_call.1']
    #allocation5 [shape = 's32[1]{0}', space=sflag, size = 0x4, scoped, tag = 'scoped memory for tpu_custom_call.1']
    #allocation6 [shape = 'u8[16384]{0}', space=vmem, size = 0x4000, scoped, tag = 'input window, operand 1, single buffered']
    #allocation7 [shape = 's32[1]{0}', space=sflag, size = 0x4, scoped, tag = 'scoped memory for tpu_custom_call.1']
    #allocation8 [shape = 'u8[512]{0}', space=vmem, size = 0x400, scoped, tag = 'output window, operand 0, single buffered']
    %7 = vsyncpa [#allocation4], 0
    %8 = vsyncpa [#allocation7], 0
    %9 = vsyncpa [#allocation5], 0
    // Predicated region
    $region2: #{tpu_custom_call.1} parent=1 // pred_check
      _
    $region3: #{tpu_custom_call.1} parent=1 // pred_check_branch
      %11 = sbr.rel (0) target = $region5
    $region4: #{tpu_custom_call.1} parent=1 // pred_region
      %s12 = sadd.s32 0, 0
      %s13 = smul.u32 4, %s12
      %s14 = ssub.s32 2, %s13
      %s15 = smul.u32 8, %s14
      %s16 = ssub.s32 32, %s15
      %s17 = sshll.u32 %s16, 4
      %18 = vsyncadd [#allocation4], %s17
      %p19 = scmp.ne.s32.totalorder 0, %s15
      %s20 = smul.addr %s13, 8
      %s21 = scalar_lea.hbm %s0, %s20
      %s22 = smul.u32 8, %s14
      %s23 = sshll.u32 %s21, 4
      %s24 = int_to_ptr.hbm [resolvable:$true] %s23
      %s25 = sshll.u32 [#allocation3], 4
      %s26 = int_to_ptr.vmem [resolvable:$true] %s25
      %s27 = sshll.u32 %s22, 4
      %31 = dma.hbm_to_vmem [thread:$0]  (%p19), %s24, %s27, %s26, [#allocation4], 128, 128, 8
    $region5: #{tpu_custom_call.1} parent=1 // pred_fallthru
      _
    // Predicated region
    $region6: #{tpu_custom_call.1} parent=1 // pred_check
      _
    $region7: #{tpu_custom_call.1} parent=1 // pred_check_branch
      %33 = sbr.rel (0) target = $region9
    $region8: #{tpu_custom_call.1} parent=1 // pred_region
      %s34 = sadd.s32 0, 0
      %s35 = smul.u32 4, %s34
      %s36 = ssub.s32 2, %s35
      %s37 = smul.u32 8, %s36
      %s38 = ssub.s32 32, %s37
      %s39 = sshll.u32 %s38, 4
      %40 = vsyncadd [#allocation7], %s39
      %p41 = scmp.ne.s32.totalorder 0, %s37
      %s42 = smul.addr %s35, 8
      %s43 = scalar_lea.hbm %s1, %s42
      %s44 = smul.u32 8, %s36
      %s45 = sshll.u32 %s43, 4
      %s46 = int_to_ptr.hbm [resolvable:$true] %s45
      %s47 = sshll.u32 [#allocation6], 4
      %s48 = int_to_ptr.vmem [resolvable:$true] %s47
      %s49 = sshll.u32 %s44, 4
      %53 = dma.hbm_to_vmem [thread:$0]  (%p41), %s46, %s49, %s48, [#allocation7], 128, 128, 8
    $region9: #{tpu_custom_call.1} parent=1 // pred_fallthru
      _
    // Predicated region
    $region10: #{tpu_custom_call.1} parent=1 // pred_check
      _
    $region11: #{tpu_custom_call.1} parent=1 // pred_check_branch
      %55 = sbr.rel (0) target = $region13
    $region12: #{tpu_custom_call.1} parent=1 // pred_region
      %57 = dma.done [#allocation4], 512
    $region13: #{tpu_custom_call.1} parent=1 // pred_fallthru
      _
    // Predicated region
    $region14: #{tpu_custom_call.1} parent=1 // pred_check
      _
    $region15: #{tpu_custom_call.1} parent=1 // pred_check_branch
      %59 = sbr.rel (0) target = $region17
    $region16: #{tpu_custom_call.1} parent=1 // pred_region
      %61 = dma.done [#allocation7], 512
    $region17: #{tpu_custom_call.1} parent=1 // pred_fallthru
      _
    %s62 = sadd.s32 0, 0
    %s63 = smul.u32 4, %s62
    %s64 = ssub.s32 2, %s63
    %s65 = smul.u32 8, %s64
    %s66 = sadd.s32 0, 0
    %s67 = smul.u32 4, %s66
    %s68 = ssub.s32 2, %s67
    %s69 = smul.u32 8, %s68
    %p70 = scmp.eq.s32.totalorder 0, 0
    // Predicated region
    $region18: #{tpu_custom_call.1} parent=1 // pred_check
      %p71 = pneg %p70
    $region19: #{tpu_custom_call.1} parent=1 // pred_check_branch
      %73 = sbr.rel (%p71) target = $region21
    $region20: #{tpu_custom_call.1} parent=1 // pred_region
      %74 = vst [vmem:[#allocation2] sm:$0xff] 0.0
      %75 = vst [vmem:[#allocation2 + $0x8] sm:$0xff] 0.0
      %76 = vst [vmem:[#allocation2 + $0x10] sm:$0xff] 0.0
      %77 = vst [vmem:[#allocation2 + $0x18] sm:$0xff] 0.0
    $region21: #{tpu_custom_call.1} parent=1 // pred_fallthru
      _
    %v78 = vld [vmem:[#allocation3] sm:$0xff]
    %v79 = vld [vmem:[#allocation3 + $0x8] sm:$0xff]
    %v80 = vld [vmem:[#allocation3 + $0x10] sm:$0xff]
    %v81 = vld [vmem:[#allocation3 + $0x18] sm:$0xff]
    %v82 = vld [vmem:[#allocation6] sm:$0xff]
    %v83 = vld [vmem:[#allocation6 + $0x8] sm:$0xff]
    %v84 = vld [vmem:[#allocation6 + $0x10] sm:$0xff]
    %v85 = vld [vmem:[#allocation6 + $0x18] sm:$0xff]
    %v86 = vmax.f32 %v78, 0.0
    %v87 = vmax.f32 %v79, 0.0
    %v88 = vmax.f32 %v80, 0.0
    %v89 = vmax.f32 %v81, 0.0
    %v90 = vmul.f32 %v78, %v82
    %v91 = vmul.f32 %v79, %v83
    %v92 = vmul.f32 %v80, %v84
    %v93 = vmul.f32 %v81, %v85
    %v94 = vsub.f32 %v86, %v90
    %v95 = vsub.f32 %v87, %v91
    %v96 = vsub.f32 %v88, %v92
    %v97 = vsub.f32 %v89, %v93
    %v98 = vand.u32 2147483647, %v78
    %v99 = vand.u32 2147483647, %v79
    %v100 = vand.u32 2147483647, %v80
    %v101 = vand.u32 2147483647, %v81
    %v102 = vsub.f32 0.0, %v98
    %v103 = vsub.f32 0.0, %v99
    %v104 = vsub.f32 0.0, %v100
    %v105 = vsub.f32 0.0, %v101
    %v106 = vmul.f32 %v102, 1.442695
    %v107 = vpow.pop %v106
    %v108 = vmul.f32 %v103, 1.442695
    %v109 = vpow.pop %v108
    %v110 = vmul.f32 %v104, 1.442695
    %v111 = vpow.pop %v110
    %v112 = vmul.f32 %v105, 1.442695
    %v113 = vpow.pop %v112
    %v114 = vadd.f32 %v107, 1.0
    %v115 = vlog2.pop %v114
    %v116 = vmul.f32 %v115, 0.6931472
    %v117 = vmul.f32 -0.5, %v107
    %v118 = vadd.f32 %v117, 1.0
    %v119 = vmul.f32 %v118, %v107
    %v120 = vand.u32 2147483647, %v107
    %vm121 = vcmp.lt.f32.partialorder %v120, 0.0004427343
    %v122 = vsel %vm121, %v119, %v116
    %v123 = vadd.f32 %v109, 1.0
    %v124 = vlog2.pop %v123
    %v125 = vmul.f32 %v124, 0.6931472
    %v126 = vmul.f32 -0.5, %v109
    %v127 = vadd.f32 %v126, 1.0
    %v128 = vmul.f32 %v127, %v109
    %v129 = vand.u32 2147483647, %v109
    %vm130 = vcmp.lt.f32.partialorder %v129, 0.0004427343
    %v131 = vsel %vm130, %v128, %v125
    %v132 = vadd.f32 %v111, 1.0
    %v133 = vlog2.pop %v132
    %v134 = vmul.f32 %v133, 0.6931472
    %v135 = vmul.f32 -0.5, %v111
    %v136 = vadd.f32 %v135, 1.0
    %v137 = vmul.f32 %v136, %v111
    %v138 = vand.u32 2147483647, %v111
    %vm139 = vcmp.lt.f32.partialorder %v138, 0.0004427343
    %v140 = vsel %vm139, %v137, %v134
    %v141 = vadd.f32 %v113, 1.0
    %v142 = vlog2.pop %v141
    %v143 = vmul.f32 %v142, 0.6931472
    %v144 = vmul.f32 -0.5, %v113
    %v145 = vadd.f32 %v144, 1.0
    %v146 = vmul.f32 %v145, %v113
    %v147 = vand.u32 2147483647, %v113
    %vm148 = vcmp.lt.f32.partialorder %v147, 0.0004427343
    %v149 = vsel %vm148, %v146, %v143
    %v150 = vadd.f32 %v94, %v122
    %v151 = vadd.f32 %v95, %v131
    %v152 = vadd.f32 %v96, %v140
    %v153 = vadd.f32 %v97, %v149
    %vm154 = vcmp.ge.f32.partialorder %v82, 0.5
    %vm155 = vcmp.ge.f32.partialorder %v83, 0.5
    %vm156 = vcmp.ge.f32.partialorder %v84, 0.5
    %vm157 = vcmp.ge.f32.partialorder %v85, 0.5
    %v158 = vsub.f32 1.0, %v82
    %v159 = vsub.f32 1.0, %v83
    %v160 = vsub.f32 1.0, %v84
    %v161 = vsub.f32 1.0, %v85
    %v162 = vmul.f32 %v158, 1.442695
    %v163 = vpow.pop %v162
    %v164 = vmul.f32 %v159, 1.442695
    %v165 = vpow.pop %v164
    %v166 = vmul.f32 %v160, 1.442695
    %v167 = vpow.pop %v166
    %v168 = vmul.f32 %v161, 1.442695
    %v169 = vpow.pop %v168
    %vm170 = vcmp.gt.f32.partialorder %v82, 0.4
    %vm171 = vcmp.gt.f32.partialorder %v83, 0.4
    %vm172 = vcmp.gt.f32.partialorder %v84, 0.4
    %vm173 = vcmp.gt.f32.partialorder %v85, 0.4
    %v174 = vsel %vm170, 1.6487212, 1.0
    %v175 = vsel %vm171, 1.6487212, 1.0
    %v176 = vsel %vm172, 1.6487212, 1.0
    %v177 = vsel %vm173, 1.6487212, 1.0
    %v178 = vsel %vm154, %v163, %v174
    %v179 = vsel %vm155, %v165, %v175
    %v180 = vsel %vm156, %v167, %v176
    %v181 = vsel %vm157, %v169, %v177
    %v182 = vmul.f32 %v150, %v178
    %v183 = vmul.f32 %v151, %v179
    %v184 = vmul.f32 %v152, %v180
    %v185 = vmul.f32 %v153, %v181
    %p186 = scmp.eq.s32.totalorder 0, 0
    %p187 = pnand %p186, %p70
    %p188 = pneg %p187
    // Predicated region
    $region22: #{tpu_custom_call.1} parent=1 // pred_check
      _
    $region23: #{tpu_custom_call.1} parent=1 // pred_check_branch
      %190 = sbr.rel (%p187) target = $region25
    $region24: #{tpu_custom_call.1} parent=1 // pred_region
      %v191 = vlaneseq
      %v192 = vshrl.u32 %v191, 7
      %v193 = vadd.s32 %v192, 8
      %v194 = vadd.s32 %v192, 16
      %v195 = vadd.s32 %v192, 24
      %vm196 = vcmp.lt.s32.totalorder %v192, 16
      %vm197 = vcmp.lt.s32.totalorder %v193, 16
      %vm198 = vcmp.lt.s32.totalorder %v194, 16
      %vm199 = vcmp.lt.s32.totalorder %v195, 16
      %v200 = vld [vmem:[#allocation2] sm:$0xff]
      %v201 = vld [vmem:[#allocation2 + $0x8] sm:$0xff]
      %v202 = vld [vmem:[#allocation2 + $0x10] sm:$0xff]
      %v203 = vld [vmem:[#allocation2 + $0x18] sm:$0xff]
      %v204 = vsel %vm196, %v182, 0.0
      %v205 = vsel %vm197, %v183, 0.0
      %v206 = vsel %vm198, %v184, 0.0
      %v207 = vsel %vm199, %v185, 0.0
      %v208 = vadd.f32 %v200, %v204
      %v209 = vadd.f32 %v201, %v205
      %v210 = vadd.f32 %v202, %v206
      %v211 = vadd.f32 %v203, %v207
      %212 = vst [vmem:[#allocation2] sm:$0xff] %v208
      %213 = vst [vmem:[#allocation2 + $0x8] sm:$0xff] %v209
      %214 = vst [vmem:[#allocation2 + $0x10] sm:$0xff] %v210
      %215 = vst [vmem:[#allocation2 + $0x18] sm:$0xff] %v211
    $region25: #{tpu_custom_call.1} parent=1 // pred_fallthru
      _
    %p216 = pneg %p188
    // Predicated region
    $region26: #{tpu_custom_call.1} parent=1 // pred_check
      _
    $region27: #{tpu_custom_call.1} parent=1 // pred_check_branch
      %218 = sbr.rel (%p188) target = $region29
    $region28: #{tpu_custom_call.1} parent=1 // pred_region
      %v219 = vld [vmem:[#allocation2] sm:$0xff]
      %v220 = vld [vmem:[#allocation2 + $0x8] sm:$0xff]
      %v221 = vld [vmem:[#allocation2 + $0x10] sm:$0xff]
      %v222 = vld [vmem:[#allocation2 + $0x18] sm:$0xff]
      %v223 = vadd.f32 %v219, %v182
      %v224 = vadd.f32 %v220, %v183
      %v225 = vadd.f32 %v221, %v184
      %v226 = vadd.f32 %v222, %v185
      %227 = vst [vmem:[#allocation2] sm:$0xff] %v223
      %228 = vst [vmem:[#allocation2 + $0x8] sm:$0xff] %v224
      %229 = vst [vmem:[#allocation2 + $0x10] sm:$0xff] %v225
      %230 = vst [vmem:[#allocation2 + $0x18] sm:$0xff] %v226
    $region29: #{tpu_custom_call.1} parent=1 // pred_fallthru
      _
    // Predicated region
    $region30: #{tpu_custom_call.1} parent=1 // pred_check
      %p231 = pneg %p70
    $region31: #{tpu_custom_call.1} parent=1 // pred_check_branch
      %233 = sbr.rel (%p231) target = $region33
    $region32: #{tpu_custom_call.1} parent=1 // pred_region
      %v234 = vld [vmem:[#allocation2] sm:$0xff]
      %v235 = vld [vmem:[#allocation2 + $0x8] sm:$0xff]
      %v236 = vld [vmem:[#allocation2 + $0x10] sm:$0xff]
      %v237 = vld [vmem:[#allocation2 + $0x18] sm:$0xff]
      %v238 = vadd.f32 %v234, %v235
      %v239 = vadd.f32 %v238, %v236
      %v240 = vadd.f32 %v239, %v237
      %v241 = vrot.slane %v240, 4
      %v242 = vadd.f32 %v240, %v241
      %v243 = vrot.slane %v242, 2
      %v244 = vadd.f32 %v242, %v243
      %v245 = vrot.slane %v244, 1
      %v246 = vadd.f32 %v244, %v245
      %247 = vst [vmem:[#allocation8] sm:$0x1] %v246
    $region33: #{tpu_custom_call.1} parent=1 // pred_fallthru
      _
    // Predicated region
    $region34: #{tpu_custom_call.1} parent=1 // pred_check
      _
    $region35: #{tpu_custom_call.1} parent=1 // pred_check_branch
      %249 = sbr.rel (0) target = $region37
    $region36: #{tpu_custom_call.1} parent=1 // pred_region
      %251 = vsyncadd [#allocation5], 0
      %s253 = sshll.u32 [#allocation8], 4
      %s254 = int_to_ptr.vmem [resolvable:$true] %s253
      %s255 = sshll.u32 %s2, 4
      %s256 = int_to_ptr.hbm [resolvable:$true] %s255
      %258 = dma.vmem_to_hbm [thread:$0]  %s254, 16, %s256, [#allocation5]
    $region37: #{tpu_custom_call.1} parent=1 // pred_fallthru
      _
    // Predicated region
    $region38: #{tpu_custom_call.1} parent=1 // pred_check
      _
    $region39: #{tpu_custom_call.1} parent=1 // pred_check_branch
      %260 = sbr.rel (0) target = $region41
    $region40: #{tpu_custom_call.1} parent=1 // pred_region
      %262 = dma.done [#allocation5], 16
    $region41: #{tpu_custom_call.1} parent=1 // pred_fallthru
      _
    %263 = vsyncpa [#allocation4], 1
    %264 = vsyncpa [#allocation7], 1
    %265 = vsyncpa [#allocation5], 1

</llo_original>
